<compile_context>
chip_gen: v7x
topology: tpu7x:2x2x1
jax: 0.10.0
libtpu: 0.0.40
codegen_flags: <defaults>
</compile_context>

<pallas_src>
import jax
import jax.numpy as jnp
from jax.experimental import pallas as pl
from jax.experimental.pallas import tpu as pltpu

IN_DIM = 10
HID = 256
OUT_DIM = 2
MAX_TILE_B = 2048   # multiple of 128/256; per-step VMEM stays < 10 MB at this size


def _round_up(n, m):
    return ((n + m - 1) // m) * m


def _choose_tiling(B):
    """Pick (tile_b, B_pad) for the batch (lane) dimension."""
    b8 = _round_up(max(B, 1), 8)
    if b8 < 256:
        # Single whole-batch block: block extent == array extent, so the
        # (8,128) divisibility rule is satisfied without padding to 128.
        return b8, b8
    # Multi-step grid: tiles must be multiples of 128 (lane-dense transposed
    # output blocks); force >= 2 steps so v7x's two TensorCores both get work.
    n_steps = max(2, -(-b8 // MAX_TILE_B))
    tile_b = _round_up(-(-b8 // n_steps), 128)
    return tile_b, _round_up(b8, tile_b)


def banknet_kernel(xt_ref, w1_ref, b1_ref, w2_ref, b2_ref, w3_ref, b3_ref, o_ref):
    # Layer 1: Linear(10, 256) + Sigmoid   (Dropout = identity in eval mode)
    xt = xt_ref[...].astype(jnp.bfloat16)                                # (10, tile_b)
    h1 = jnp.dot(w1_ref[...], xt, preferred_element_type=jnp.float32)    # (256, tile_b)
    h1 = jax.nn.sigmoid(h1 + b1_ref[...])
    # Layer 2: Linear(256, 256) + Sigmoid  (Dropout = identity in eval mode)
    h2 = jnp.dot(w2_ref[...], h1.astype(jnp.bfloat16),
                 preferred_element_type=jnp.float32)                     # (256, tile_b)
    h2 = jax.nn.sigmoid(h2 + b2_ref[...])
    # Layer 3: Linear(256, 2) -> transposed logits (2, tile_b)
    out = jnp.dot(w3_ref[...], h2.astype(jnp.bfloat16),
                  preferred_element_type=jnp.float32)
    o_ref[...] = (out + b3_ref[...]).astype(o_ref.dtype)


def banknet_forward(x, params):
    """x: (B, 10) float32.  Returns (B, 2) float32 logits."""
    B = x.shape[0]
    tile_b, B_pad = _choose_tiling(B)

    # Transposed, batch-padded input.  x is only 40 B/row so this is cheap; the
    # transposed layout is what lets the kernel write 8 B/row of output instead
    # of a 512 B/row padded slab.
    xt = x.T
    if B_pad != B:
        xt = jnp.pad(xt, ((0, 0), (0, B_pad - B)))

    grid = (B_pad // tile_b,)

    flops = 2 * B_pad * (IN_DIM * HID + HID * HID + HID * OUT_DIM)
    transcendentals = 4 * HID * B_pad  # 2 sigmoid layers, ~(exp + recip) per element
    bytes_accessed = (
        4 * B_pad * (IN_DIM + OUT_DIM)                      # x^T in, logits^T out (f32)
        + 2 * (HID * IN_DIM + HID * HID + OUT_DIM * HID)    # bf16 weights
        + 4 * (HID + HID + OUT_DIM)                         # f32 biases
    )

    out_t = pl.pallas_call(
        banknet_kernel,
        out_shape=jax.ShapeDtypeStruct((OUT_DIM, B_pad), jnp.float32),
        grid_spec=pltpu.PrefetchScalarGridSpec(
            num_scalar_prefetch=0,
            grid=grid,
            in_specs=[
                # x^T: tiled over the batch (lane) dimension.
                pl.BlockSpec((IN_DIM, tile_b), lambda i: (0, i)),
                # Weights / biases: full arrays, grid-invariant blocks
                # (constant index_map => not re-fetched across grid steps).
                pl.BlockSpec((HID, IN_DIM), lambda i: (0, 0)),
                pl.BlockSpec((HID, 1), lambda i: (0, 0)),
                pl.BlockSpec((HID, HID), lambda i: (0, 0)),
                pl.BlockSpec((HID, 1), lambda i: (0, 0)),
                pl.BlockSpec((OUT_DIM, HID), lambda i: (0, 0)),
                pl.BlockSpec((OUT_DIM, 1), lambda i: (0, 0)),
            ],
            out_specs=pl.BlockSpec((OUT_DIM, tile_b), lambda i: (0, i)),
        ),
        compiler_params=pltpu.CompilerParams(
            dimension_semantics=("parallel",),
            vmem_limit_bytes=32 * 1024 * 1024,
        ),
        cost_estimate=pl.CostEstimate(
            flops=flops,
            transcendentals=transcendentals,
            bytes_accessed=bytes_accessed,
        ),
    )(xt, params["w1"], params["b1"], params["w2"], params["b2"],
      params["w3"], params["b3"])

    # (2, B_pad) -> (B, 2): drop batch padding, back to row-major logits
    # (an 8 B/row slice+transpose -- negligible vs. the old (B,128) slab pass).
    return out_t[:, :B].T


def xavier_uniform(key, fan_out, fan_in):
    # Matches torch.nn.init.xavier_uniform_: bound = sqrt(6 / (fan_in + fan_out)).
    bound = (6.0 / (fan_in + fan_out)) ** 0.5
    w = jax.random.uniform(key, (fan_out, fan_in), dtype=jnp.float32,
                           minval=-bound, maxval=bound)
    # PyTorch (out_features, in_features) layout, stored bf16 for the MXU.
    return w.astype(jnp.bfloat16)


def init_params(key):
    k1, k2, k3 = jax.random.split(key, 3)
    return {
        "w1": xavier_uniform(k1, HID, IN_DIM),
        "b1": jnp.zeros((HID, 1), jnp.float32),
        "w2": xavier_uniform(k2, HID, HID),
        "b2": jnp.zeros((HID, 1), jnp.float32),
        "w3": xavier_uniform(k3, OUT_DIM, HID),
        "b3": jnp.zeros((OUT_DIM, 1), jnp.float32),
    }


def banknet_reference(x, params):
    """Pure-JAX f32 reference (eval-mode dropout) using the same bf16-rounded weights."""
    w1 = params["w1"].astype(jnp.float32)
    w2 = params["w2"].astype(jnp.float32)
    w3 = params["w3"].astype(jnp.float32)
    h1 = jax.nn.sigmoid(x @ w1.T + params["b1"].T)
    h2 = jax.nn.sigmoid(h1 @ w2.T + params["b2"].T)
    return h2 @ w3.T + params["b3"].T


if __name__ == "__main__":
    key = jax.random.PRNGKey(0)
    pkey, xkey = jax.random.split(key)

    params = init_params(pkey)
    B = 16  # small demo batch; wrapper handles any B via tiling/padding
    x = jax.random.normal(xkey, (B, IN_DIM), dtype=jnp.float32)

    out = banknet_forward(x, params)
    out = jax.block_until_ready(out)

    ref = banknet_reference(x, params)
    assert out.shape == (B, OUT_DIM)
    # bf16 MXU operands (f32 accumulation) => relaxed tolerance vs. pure-f32 math.
    assert jnp.allclose(out, ref, atol=3e-2, rtol=3e-2)

    print("KERNEL_OK")
</pallas_src>

<mosaic_0001>
module attributes {stable_mosaic.version = 11 : i64} {
  func.func @banknet_kernel(%arg0: i32, %arg1: memref<10x16xf32, #tpu.memory_space<vmem>>, %arg2: memref<256x10xbf16, #tpu.memory_space<vmem>>, %arg3: memref<256x1xf32, #tpu.memory_space<vmem>>, %arg4: memref<256x256xbf16, #tpu.memory_space<vmem>>, %arg5: memref<256x1xf32, #tpu.memory_space<vmem>>, %arg6: memref<2x256xbf16, #tpu.memory_space<vmem>>, %arg7: memref<2x1xf32, #tpu.memory_space<vmem>>, %arg8: memref<2x16xf32, #tpu.memory_space<vmem>>) attributes {dimension_semantics = [#tpu.dimension_semantics<parallel>], iteration_bounds = array<i64: 1>, scalar_prefetch = 0 : i64, scratch_operands = 0 : i64, tpu.core_type = #tpu.core_type<tc>, window_params = [{transform_indices = @transform_0, window_bounds = array<i64: 10, 16>}, {pipeline_mode = #tpu.pipeline_mode<synchronous>, transform_indices = @transform_1, window_bounds = array<i64: 256, 10>}, {pipeline_mode = #tpu.pipeline_mode<synchronous>, transform_indices = @transform_2, window_bounds = array<i64: 256, 1>}, {pipeline_mode = #tpu.pipeline_mode<synchronous>, transform_indices = @transform_3, window_bounds = array<i64: 256, 256>}, {pipeline_mode = #tpu.pipeline_mode<synchronous>, transform_indices = @transform_4, window_bounds = array<i64: 256, 1>}, {pipeline_mode = #tpu.pipeline_mode<synchronous>, transform_indices = @transform_5, window_bounds = array<i64: 2, 256>}, {pipeline_mode = #tpu.pipeline_mode<synchronous>, transform_indices = @transform_6, window_bounds = array<i64: 2, 1>}, {transform_indices = @transform_7, window_bounds = array<i64: 2, 16>}]} {
    %c0 = arith.constant 0 : index
    %c0_0 = arith.constant 0 : index
    %0 = vector.load %arg1[%c0, %c0_0] : memref<10x16xf32, #tpu.memory_space<vmem>>, vector<10x16xf32>
    %1 = arith.truncf %0 : vector<10x16xf32> to vector<10x16xbf16>
    %c0_1 = arith.constant 0 : index
    %c0_2 = arith.constant 0 : index
    %2 = vector.load %arg2[%c0_1, %c0_2] : memref<256x10xbf16, #tpu.memory_space<vmem>>, vector<256x10xbf16>
    %cst = arith.constant dense<0.000000e+00> : vector<256x16xf32>
    %3 = tpu.matmul %2, %1, %cst {dimension_numbers = #tpu.dot_dimension_numbers<[1], [0], [0], [1], [0, 0, 1, 1], [], []>} : vector<256x10xbf16>, vector<10x16xbf16>, vector<256x16xf32> -> vector<256x16xf32>
    %c0_3 = arith.constant 0 : index
    %c0_4 = arith.constant 0 : index
    %4 = vector.load %arg3[%c0_3, %c0_4] : memref<256x1xf32, #tpu.memory_space<vmem>>, vector<256x1xf32>
    %5 = vector.broadcast %4 : vector<256x1xf32> to vector<256x16xf32>
    %6 = arith.addf %3, %5 : vector<256x16xf32>
    %7 = arith.negf %6 : vector<256x16xf32>
    %8 = math.exp %7 : vector<256x16xf32>
    %cst_5 = arith.constant 1.000000e+00 : f32
    %9 = vector.broadcast %cst_5 : f32 to vector<256x16xf32>
    %10 = arith.addf %9, %8 : vector<256x16xf32>
    %11 = arith.divf %9, %10 : vector<256x16xf32>
    %c0_6 = arith.constant 0 : index
    %c0_7 = arith.constant 0 : index
    %12 = vector.load %arg4[%c0_6, %c0_7] : memref<256x256xbf16, #tpu.memory_space<vmem>>, vector<256x256xbf16>
    %13 = arith.truncf %11 : vector<256x16xf32> to vector<256x16xbf16>
    %cst_8 = arith.constant dense<0.000000e+00> : vector<256x16xf32>
    %14 = tpu.matmul %12, %13, %cst_8 {dimension_numbers = #tpu.dot_dimension_numbers<[1], [0], [0], [1], [0, 0, 1, 1], [], []>} : vector<256x256xbf16>, vector<256x16xbf16>, vector<256x16xf32> -> vector<256x16xf32>
    %c0_9 = arith.constant 0 : index
    %c0_10 = arith.constant 0 : index
    %15 = vector.load %arg5[%c0_9, %c0_10] : memref<256x1xf32, #tpu.memory_space<vmem>>, vector<256x1xf32>
    %16 = vector.broadcast %15 : vector<256x1xf32> to vector<256x16xf32>
    %17 = arith.addf %14, %16 : vector<256x16xf32>
    %18 = arith.negf %17 : vector<256x16xf32>
    %19 = math.exp %18 : vector<256x16xf32>
    %cst_11 = arith.constant 1.000000e+00 : f32
    %20 = vector.broadcast %cst_11 : f32 to vector<256x16xf32>
    %21 = arith.addf %20, %19 : vector<256x16xf32>
    %22 = arith.divf %20, %21 : vector<256x16xf32>
    %c0_12 = arith.constant 0 : index
    %c0_13 = arith.constant 0 : index
    %23 = vector.load %arg6[%c0_12, %c0_13] : memref<2x256xbf16, #tpu.memory_space<vmem>>, vector<2x256xbf16>
    %24 = arith.truncf %22 : vector<256x16xf32> to vector<256x16xbf16>
    %cst_14 = arith.constant dense<0.000000e+00> : vector<2x16xf32>
    %25 = tpu.matmul %23, %24, %cst_14 {dimension_numbers = #tpu.dot_dimension_numbers<[1], [0], [0], [1], [0, 0, 1, 1], [], []>} : vector<2x256xbf16>, vector<256x16xbf16>, vector<2x16xf32> -> vector<2x16xf32>
    %c0_15 = arith.constant 0 : index
    %c0_16 = arith.constant 0 : index
    %26 = vector.load %arg7[%c0_15, %c0_16] : memref<2x1xf32, #tpu.memory_space<vmem>>, vector<2x1xf32>
    %27 = vector.broadcast %26 : vector<2x1xf32> to vector<2x16xf32>
    %28 = arith.addf %25, %27 : vector<2x16xf32>
    %c0_17 = arith.constant 0 : index
    %c0_18 = arith.constant 0 : index
    %29 = vector.load %arg8[%c0_17, %c0_18] : memref<2x16xf32, #tpu.memory_space<vmem>>, vector<2x16xf32>
    tpu.vector_store %arg8[%c0_17, %c0_18], %28 {strides = array<i32>} : memref<2x16xf32, #tpu.memory_space<vmem>>, vector<2x16xf32>,
    return
  }
  func.func @transform_0(%arg0: i32) -> (i32, i32) {
    %c0_i32 = arith.constant 0 : i32
    %c0_i32_0 = arith.constant 0 : i32
    return %c0_i32, %arg0 : i32, i32
  }
  func.func @transform_1(%arg0: i32) -> (i32, i32) {
    %c0_i32 = arith.constant 0 : i32
    %c0_i32_0 = arith.constant 0 : i32
    %c0_i32_1 = arith.constant 0 : i32
    return %c0_i32, %c0_i32_0 : i32, i32
  }
  func.func @transform_2(%arg0: i32) -> (i32, i32) {
    %c0_i32 = arith.constant 0 : i32
    %c0_i32_0 = arith.constant 0 : i32
    %c0_i32_1 = arith.constant 0 : i32
    return %c0_i32, %c0_i32_0 : i32, i32
  }
  func.func @transform_3(%arg0: i32) -> (i32, i32) {
    %c0_i32 = arith.constant 0 : i32
    %c0_i32_0 = arith.constant 0 : i32
    %c0_i32_1 = arith.constant 0 : i32
    return %c0_i32, %c0_i32_0 : i32, i32
  }
  func.func @transform_4(%arg0: i32) -> (i32, i32) {
    %c0_i32 = arith.constant 0 : i32
    %c0_i32_0 = arith.constant 0 : i32
    %c0_i32_1 = arith.constant 0 : i32
    return %c0_i32, %c0_i32_0 : i32, i32
  }
  func.func @transform_5(%arg0: i32) -> (i32, i32) {
    %c0_i32 = arith.constant 0 : i32
    %c0_i32_0 = arith.constant 0 : i32
    %c0_i32_1 = arith.constant 0 : i32
    return %c0_i32, %c0_i32_0 : i32, i32
  }
  func.func @transform_6(%arg0: i32) -> (i32, i32) {
    %c0_i32 = arith.constant 0 : i32
    %c0_i32_0 = arith.constant 0 : i32
    %c0_i32_1 = arith.constant 0 : i32
    return %c0_i32, %c0_i32_0 : i32, i32
  }
  func.func @transform_7(%arg0: i32) -> (i32, i32) {
    %c0_i32 = arith.constant 0 : i32
    %c0_i32_0 = arith.constant 0 : i32
    return %c0_i32, %arg0 : i32, i32
  }
}

</mosaic_0001>

<llo_original>
// kernel: tpu_custom_call.1
$region0: #{tpu_custom_call.1}
  #allocation0 [shape = 'u32[]', space=smem, size = 0x4, offset = 0x4, fixed_abs, tag = 'smem constant byte address 0x4 - core index']
  #allocation1 [shape = 'u32[144,128]{1,0:T(1,128)}', space=vmem, size = 0x12000, scoped, tag = 'internal scratch']
  %s0 = inlined_call_operand.vmem [shape: f32[10,16], index: 0, kind: input, shape index: {}]
  %s1 = inlined_call_operand.vmem [shape: bf16[256,10], index: 1, kind: input, shape index: {}]
  %s2 = inlined_call_operand.vmem [shape: f32[256,1], index: 2, kind: input, shape index: {}]
  %s3 = inlined_call_operand.vmem [shape: bf16[256,256], index: 3, kind: input, shape index: {}]
  %s4 = inlined_call_operand.vmem [shape: f32[256,1], index: 4, kind: input, shape index: {}]
  %s5 = inlined_call_operand.vmem [shape: bf16[2,256], index: 5, kind: input, shape index: {}]
  %s6 = inlined_call_operand.vmem [shape: f32[2,1], index: 6, kind: input, shape index: {}]
  %s7 = inlined_call_operand.hbm [shape: f32[2,16], index: 7, kind: output, shape index: {}]
  %s8 = sld [smem:[#allocation0]]
  $region38: #{tpu_custom_call.1} parent=0
    _
  %s10 = ssub.s32 1, %s8
  %s11 = scalar_select 0, %s10, %s8
  $region1: #{tpu_custom_call.1} parent=0
    #allocation2 [shape = 'u8[1024]{0}', space=vmem, size = 0x400, scoped, tag = 'output window, operand 0, single buffered']
    #allocation3 [shape = 's32[1]{0}', space=sflag, size = 0x4, scoped, tag = 'scoped memory for tpu_custom_call.1']
    %12 = vsyncpa [#allocation3], 0
    // Predicated region
    $region2: #{tpu_custom_call.1} parent=1 // pred_check
      _
    $region3: #{tpu_custom_call.1} parent=1 // pred_check_branch
      %14 = sbr.rel (0) target = $region5
    $region4: #{tpu_custom_call.1} parent=1 // pred_region
      _
    $region5: #{tpu_custom_call.1} parent=1 // pred_fallthru
      _
    // Predicated region
    $region6: #{tpu_custom_call.1} parent=1 // pred_check
      _
    $region7: #{tpu_custom_call.1} parent=1 // pred_check_branch
      %16 = sbr.rel (0) target = $region9
    $region8: #{tpu_custom_call.1} parent=1 // pred_region
      _
    $region9: #{tpu_custom_call.1} parent=1 // pred_fallthru
      _
    // Predicated region
    $region10: #{tpu_custom_call.1} parent=1 // pred_check
      _
    $region11: #{tpu_custom_call.1} parent=1 // pred_check_branch
      %18 = sbr.rel (0) target = $region13
    $region12: #{tpu_custom_call.1} parent=1 // pred_region
      _
    $region13: #{tpu_custom_call.1} parent=1 // pred_fallthru
      _
    // Predicated region
    $region14: #{tpu_custom_call.1} parent=1 // pred_check
      _
    $region15: #{tpu_custom_call.1} parent=1 // pred_check_branch
      %20 = sbr.rel (0) target = $region17
    $region16: #{tpu_custom_call.1} parent=1 // pred_region
      _
    $region17: #{tpu_custom_call.1} parent=1 // pred_fallthru
      _
    // Predicated region
    $region18: #{tpu_custom_call.1} parent=1 // pred_check
      _
    $region19: #{tpu_custom_call.1} parent=1 // pred_check_branch
      %22 = sbr.rel (0) target = $region21
    $region20: #{tpu_custom_call.1} parent=1 // pred_region
      _
    $region21: #{tpu_custom_call.1} parent=1 // pred_fallthru
      _
    // Predicated region
    $region22: #{tpu_custom_call.1} parent=1 // pred_check
      _
    $region23: #{tpu_custom_call.1} parent=1 // pred_check_branch
      %24 = sbr.rel (0) target = $region25
    $region24: #{tpu_custom_call.1} parent=1 // pred_region
      _
    $region25: #{tpu_custom_call.1} parent=1 // pred_fallthru
      _
    // Predicated region
    $region26: #{tpu_custom_call.1} parent=1 // pred_check
      _
    $region27: #{tpu_custom_call.1} parent=1 // pred_check_branch
      %26 = sbr.rel (0) target = $region29
    $region28: #{tpu_custom_call.1} parent=1 // pred_region
      _
    $region29: #{tpu_custom_call.1} parent=1 // pred_fallthru
      _
    %v28 = vld [vmem:[%s0] sm:$0xff]
    %v29 = vld [vmem:[%s0 + $0x8] sm:$0x3]
    %v30 = vpack.c.bf16 %v29, %v28
    %v31 = vld [vmem:[%s1] sm:$0xf]
    %v32 = vld [vmem:[%s1 + $0x4] sm:$0xf]
    %v33 = vld [vmem:[%s1 + $0x8] sm:$0xf]
    %v34 = vld [vmem:[%s1 + $0xc] sm:$0xf]
    %v35 = vld [vmem:[%s1 + $0x10] sm:$0xf]
    %v36 = vld [vmem:[%s1 + $0x14] sm:$0xf]
    %v37 = vld [vmem:[%s1 + $0x18] sm:$0xf]
    %v38 = vld [vmem:[%s1 + $0x1c] sm:$0xf]
    %v39 = vld [vmem:[%s1 + $0x20] sm:$0xf]
    %v40 = vld [vmem:[%s1 + $0x24] sm:$0xf]
    %v41 = vld [vmem:[%s1 + $0x28] sm:$0xf]
    %v42 = vld [vmem:[%s1 + $0x2c] sm:$0xf]
    %v43 = vld [vmem:[%s1 + $0x30] sm:$0xf]
    %v44 = vld [vmem:[%s1 + $0x34] sm:$0xf]
    %v45 = vld [vmem:[%s1 + $0x38] sm:$0xf]
    %v46 = vld [vmem:[%s1 + $0x3c] sm:$0xf]
    %v47 = vld [vmem:[%s1 + $0x40] sm:$0xf]
    %v48 = vld [vmem:[%s1 + $0x44] sm:$0xf]
    %v49 = vld [vmem:[%s1 + $0x48] sm:$0xf]
    %v50 = vld [vmem:[%s1 + $0x4c] sm:$0xf]
    %v51 = vld [vmem:[%s1 + $0x50] sm:$0xf]
    %v52 = vld [vmem:[%s1 + $0x54] sm:$0xf]
    %v53 = vld [vmem:[%s1 + $0x58] sm:$0xf]
    %v54 = vld [vmem:[%s1 + $0x5c] sm:$0xf]
    %v55 = vld [vmem:[%s1 + $0x60] sm:$0xf]
    %v56 = vld [vmem:[%s1 + $0x64] sm:$0xf]
    %v57 = vld [vmem:[%s1 + $0x68] sm:$0xf]
    %v58 = vld [vmem:[%s1 + $0x6c] sm:$0xf]
    %v59 = vld [vmem:[%s1 + $0x70] sm:$0xf]
    %v60 = vld [vmem:[%s1 + $0x74] sm:$0xf]
    %v61 = vld [vmem:[%s1 + $0x78] sm:$0xf]
    %v62 = vld [vmem:[%s1 + $0x7c] sm:$0xf]
    %v63 = vld [vmem:[%s2] sm:$0xff]
    %v64 = vld [vmem:[%s2 + $0x8] sm:$0xff]
    %v65 = vld [vmem:[%s2 + $0x10] sm:$0xff]
    %v66 = vld [vmem:[%s2 + $0x18] sm:$0xff]
    %v67 = vld [vmem:[%s2 + $0x20] sm:$0xff]
    %v68 = vld [vmem:[%s2 + $0x28] sm:$0xff]
    %v69 = vld [vmem:[%s2 + $0x30] sm:$0xff]
    %v70 = vld [vmem:[%s2 + $0x38] sm:$0xff]
    %v71 = vld [vmem:[%s2 + $0x40] sm:$0xff]
    %v72 = vld [vmem:[%s2 + $0x48] sm:$0xff]
    %v73 = vld [vmem:[%s2 + $0x50] sm:$0xff]
    %v74 = vld [vmem:[%s2 + $0x58] sm:$0xff]
    %v75 = vld [vmem:[%s2 + $0x60] sm:$0xff]
    %v76 = vld [vmem:[%s2 + $0x68] sm:$0xff]
    %v77 = vld [vmem:[%s2 + $0x70] sm:$0xff]
    %v78 = vld [vmem:[%s2 + $0x78] sm:$0xff]
    %v79 = vld [vmem:[%s2 + $0x80] sm:$0xff]
    %v80 = vld [vmem:[%s2 + $0x88] sm:$0xff]
    %v81 = vld [vmem:[%s2 + $0x90] sm:$0xff]
    %v82 = vld [vmem:[%s2 + $0x98] sm:$0xff]
    %v83 = vld [vmem:[%s2 + $0xa0] sm:$0xff]
    %v84 = vld [vmem:[%s2 + $0xa8] sm:$0xff]
    %v85 = vld [vmem:[%s2 + $0xb0] sm:$0xff]
    %v86 = vld [vmem:[%s2 + $0xb8] sm:$0xff]
    %v87 = vld [vmem:[%s2 + $0xc0] sm:$0xff]
    %v88 = vld [vmem:[%s2 + $0xc8] sm:$0xff]
    %v89 = vld [vmem:[%s2 + $0xd0] sm:$0xff]
    %v90 = vld [vmem:[%s2 + $0xd8] sm:$0xff]
    %v91 = vld [vmem:[%s2 + $0xe0] sm:$0xff]
    %v92 = vld [vmem:[%s2 + $0xe8] sm:$0xff]
    %v93 = vld [vmem:[%s2 + $0xf0] sm:$0xff]
    %v94 = vld [vmem:[%s2 + $0xf8] sm:$0xff]
    %96 = vset.pattern.permute.xlu0 0
    %97 = vperm.xlu0 %96, %v63
    %v98 = vpop.permute.xlu0 %97
    %101 = vset.pattern.permute.xlu0 0
    %102 = vperm.xlu0 %101, %v64
    %v103 = vpop.permute.xlu0 %102
    %106 = vset.pattern.permute.xlu0 0
    %107 = vperm.xlu0 %106, %v65
    %v108 = vpop.permute.xlu0 %107
    %111 = vset.pattern.permute.xlu0 0
    %112 = vperm.xlu0 %111, %v66
    %v113 = vpop.permute.xlu0 %112
    %116 = vset.pattern.permute.xlu0 0
    %117 = vperm.xlu0 %116, %v67
    %v118 = vpop.permute.xlu0 %117
    %121 = vset.pattern.permute.xlu0 0
    %122 = vperm.xlu0 %121, %v68
    %v123 = vpop.permute.xlu0 %122
    %126 = vset.pattern.permute.xlu0 0
    %127 = vperm.xlu0 %126, %v69
    %v128 = vpop.permute.xlu0 %127
    %131 = vset.pattern.permute.xlu0 0
    %132 = vperm.xlu0 %131, %v70
    %v133 = vpop.permute.xlu0 %132
    %136 = vset.pattern.permute.xlu0 0
    %137 = vperm.xlu0 %136, %v71
    %v138 = vpop.permute.xlu0 %137
    %141 = vset.pattern.permute.xlu0 0
    %142 = vperm.xlu0 %141, %v72
    %v143 = vpop.permute.xlu0 %142
    %146 = vset.pattern.permute.xlu0 0
    %147 = vperm.xlu0 %146, %v73
    %v148 = vpop.permute.xlu0 %147
    %151 = vset.pattern.permute.xlu0 0
    %152 = vperm.xlu0 %151, %v74
    %v153 = vpop.permute.xlu0 %152
    %156 = vset.pattern.permute.xlu0 0
    %157 = vperm.xlu0 %156, %v75
    %v158 = vpop.permute.xlu0 %157
    %161 = vset.pattern.permute.xlu0 0
    %162 = vperm.xlu0 %161, %v76
    %v163 = vpop.permute.xlu0 %162
    %166 = vset.pattern.permute.xlu0 0
    %167 = vperm.xlu0 %166, %v77
    %v168 = vpop.permute.xlu0 %167
    %171 = vset.pattern.permute.xlu0 0
    %172 = vperm.xlu0 %171, %v78
    %v173 = vpop.permute.xlu0 %172
    %176 = vset.pattern.permute.xlu0 0
    %177 = vperm.xlu0 %176, %v79
    %v178 = vpop.permute.xlu0 %177
    %181 = vset.pattern.permute.xlu0 0
    %182 = vperm.xlu0 %181, %v80
    %v183 = vpop.permute.xlu0 %182
    %186 = vset.pattern.permute.xlu0 0
    %187 = vperm.xlu0 %186, %v81
    %v188 = vpop.permute.xlu0 %187
    %191 = vset.pattern.permute.xlu0 0
    %192 = vperm.xlu0 %191, %v82
    %v193 = vpop.permute.xlu0 %192
    %196 = vset.pattern.permute.xlu0 0
    %197 = vperm.xlu0 %196, %v83
    %v198 = vpop.permute.xlu0 %197
    %201 = vset.pattern.permute.xlu0 0
    %202 = vperm.xlu0 %201, %v84
    %v203 = vpop.permute.xlu0 %202
    %206 = vset.pattern.permute.xlu0 0
    %207 = vperm.xlu0 %206, %v85
    %v208 = vpop.permute.xlu0 %207
    %211 = vset.pattern.permute.xlu0 0
    %212 = vperm.xlu0 %211, %v86
    %v213 = vpop.permute.xlu0 %212
    %216 = vset.pattern.permute.xlu0 0
    %217 = vperm.xlu0 %216, %v87
    %v218 = vpop.permute.xlu0 %217
    %221 = vset.pattern.permute.xlu0 0
    %222 = vperm.xlu0 %221, %v88
    %v223 = vpop.permute.xlu0 %222
    %226 = vset.pattern.permute.xlu0 0
    %227 = vperm.xlu0 %226, %v89
    %v228 = vpop.permute.xlu0 %227
    %231 = vset.pattern.permute.xlu0 0
    %232 = vperm.xlu0 %231, %v90
    %v233 = vpop.permute.xlu0 %232
    %236 = vset.pattern.permute.xlu0 0
    %237 = vperm.xlu0 %236, %v91
    %v238 = vpop.permute.xlu0 %237
    %241 = vset.pattern.permute.xlu0 0
    %242 = vperm.xlu0 %241, %v92
    %v243 = vpop.permute.xlu0 %242
    %246 = vset.pattern.permute.xlu0 0
    %247 = vperm.xlu0 %246, %v93
    %v248 = vpop.permute.xlu0 %247
    %251 = vset.pattern.permute.xlu0 0
    %252 = vperm.xlu0 %251, %v94
    %v253 = vpop.permute.xlu0 %252
    %v287 = vunpack.c.l.b16 %v31
    %v288 = vunpack.c.l.b16 %v32
    %v289 = vunpack.c.l.b16 %v33
    %v290 = vunpack.c.l.b16 %v34
    %v291 = vunpack.c.l.b16 %v35
    %v292 = vunpack.c.l.b16 %v36
    %v293 = vunpack.c.l.b16 %v37
    %v294 = vunpack.c.l.b16 %v38
    %v295 = vunpack.c.l.b16 %v39
    %v296 = vunpack.c.l.b16 %v40
    %v297 = vunpack.c.l.b16 %v41
    %v298 = vunpack.c.l.b16 %v42
    %v299 = vunpack.c.l.b16 %v43
    %v300 = vunpack.c.l.b16 %v44
    %v301 = vunpack.c.l.b16 %v45
    %v302 = vunpack.c.l.b16 %v46
    %v303 = vunpack.c.l.b16 %v47
    %v304 = vunpack.c.l.b16 %v48
    %v305 = vunpack.c.l.b16 %v49
    %v306 = vunpack.c.l.b16 %v50
    %v307 = vunpack.c.l.b16 %v51
    %v308 = vunpack.c.l.b16 %v52
    %v309 = vunpack.c.l.b16 %v53
    %v310 = vunpack.c.l.b16 %v54
    %v311 = vunpack.c.l.b16 %v55
    %v312 = vunpack.c.l.b16 %v56
    %v313 = vunpack.c.l.b16 %v57
    %v314 = vunpack.c.l.b16 %v58
    %v315 = vunpack.c.l.b16 %v59
    %v316 = vunpack.c.l.b16 %v60
    %v317 = vunpack.c.l.b16 %v61
    %v318 = vunpack.c.l.b16 %v62
    %v319 = vpack.c.b16 %v288, %v287
    %v320 = vpack.c.b16 %v290, %v289
    %v321 = vpack.c.b16 %v292, %v291
    %v322 = vpack.c.b16 %v294, %v293
    %v323 = vpack.c.b16 %v296, %v295
    %v324 = vpack.c.b16 %v298, %v297
    %v325 = vpack.c.b16 %v300, %v299
    %v326 = vpack.c.b16 %v302, %v301
    %v327 = vpack.c.b16 %v304, %v303
    %v328 = vpack.c.b16 %v306, %v305
    %v329 = vpack.c.b16 %v308, %v307
    %v330 = vpack.c.b16 %v310, %v309
    %v331 = vpack.c.b16 %v312, %v311
    %v332 = vpack.c.b16 %v314, %v313
    %v333 = vpack.c.b16 %v316, %v315
    %v334 = vpack.c.b16 %v318, %v317
    %vm335 = vcmask 80896
    %v337 = vsel %vm335, %v319, 0
    %v340 = vsel %vm335, %v320, 0
    %v343 = vsel %vm335, %v321, 0
    %v346 = vsel %vm335, %v322, 0
    %v349 = vsel %vm335, %v323, 0
    %v352 = vsel %vm335, %v324, 0
    %v355 = vsel %vm335, %v325, 0
    %v358 = vsel %vm335, %v326, 0
    %v361 = vsel %vm335, %v327, 0
    %v364 = vsel %vm335, %v328, 0
    %v367 = vsel %vm335, %v329, 0
    %v370 = vsel %vm335, %v330, 0
    %v373 = vsel %vm335, %v331, 0
    %v376 = vsel %vm335, %v332, 0
    %v379 = vsel %vm335, %v333, 0
    %v382 = vsel %vm335, %v334, 0
    %vm384 = vcmask 1044480
    %v386 = vsel %vm384, %v30, 0
    %388 = vmatprep.subr.bf16.mxu0 0
    %389 = vmatpush1.bf16.msra.mxu0 %v386
    %390 = vmatprep.subr.bf16.mxu0 0
    %391 = vmatpush1.bf16.msra.mxu0 0
    %392 = vmatprep.subr.bf16.mxu0 0
    %393 = vmatpush1.bf16.msra.mxu0 0
    %394 = vmatprep.subr.bf16.mxu0 0
    %395 = vmatpush1.bf16.msra.mxu0 0
    %396 = vmatprep.subr.bf16.mxu0 0
    %397 = vmatpush1.bf16.msra.mxu0 0
    %398 = vmatprep.subr.bf16.mxu0 0
    %399 = vmatpush1.bf16.msra.mxu0 0
    %400 = vmatprep.subr.bf16.mxu0 0
    %401 = vmatpush1.bf16.msra.mxu0 0
    %402 = vmatprep.subr.bf16.mxu0 0
    %403 = vmatpush1.bf16.msra.mxu0 0
    %404 = vmatprep.subr.bf16.mxu0 0
    %405 = vmatpush1.bf16.msra.mxu0 0
    %406 = vmatprep.subr.bf16.mxu0 0
    %407 = vmatpush1.bf16.msra.mxu0 0
    %408 = vmatprep.subr.bf16.mxu0 0
    %409 = vmatpush1.bf16.msra.mxu0 0
    %410 = vmatprep.subr.bf16.mxu0 0
    %411 = vmatpush1.bf16.msra.mxu0 0
    %412 = vmatprep.subr.bf16.mxu0 0
    %413 = vmatpush1.bf16.msra.mxu0 0
    %414 = vmatprep.subr.bf16.mxu0 0
    %415 = vmatpush1.bf16.msra.mxu0 0
    %416 = vmatprep.subr.bf16.mxu0 0
    %417 = vmatpush1.bf16.msra.mxu0 0
    %418 = vmatprep.subr.bf16.mxu0 0
    %419 = vmatpush1.bf16.msra.mxu0 0
    %420 = vmatprep.mubr.bf16.mxu0 0
    %421 = vmatmul.mubr.bf16.gmra.mrb[0].mxu0 %v337
    %v422 = vpop.f32.mrb[0].mxu0
    %v423 = vadd.f32 %v98, %v422
    %v424 = vpop.f32.mrb[0].mxu0
    %v425 = vpop.f32.mrb[0].mxu0
    %v426 = vadd.f32 %v103, %v425
    %v427 = vpop.f32.mrb[0].mxu0
    %428 = vmatprep.mubr.bf16.mxu0 0
    %429 = vmatmul.mubr.bf16.gmra.mrb[0].mxu0 %v340
    %v430 = vpop.f32.mrb[0].mxu0
    %v431 = vadd.f32 %v108, %v430
    %v432 = vpop.f32.mrb[0].mxu0
    %v433 = vpop.f32.mrb[0].mxu0
    %v434 = vadd.f32 %v113, %v433
    %v435 = vpop.f32.mrb[0].mxu0
    %436 = vmatprep.mubr.bf16.mxu0 0
    %437 = vmatmul.mubr.bf16.gmra.mrb[0].mxu0 %v343
    %v438 = vpop.f32.mrb[0].mxu0
    %v439 = vadd.f32 %v118, %v438
    %v440 = vpop.f32.mrb[0].mxu0
    %v441 = vpop.f32.mrb[0].mxu0
    %v442 = vadd.f32 %v123, %v441
    %v443 = vpop.f32.mrb[0].mxu0
    %444 = vmatprep.mubr.bf16.mxu0 0
    %445 = vmatmul.mubr.bf16.gmra.mrb[0].mxu0 %v346
    %v446 = vpop.f32.mrb[0].mxu0
    %v447 = vadd.f32 %v128, %v446
    %v448 = vpop.f32.mrb[0].mxu0
    %v449 = vpop.f32.mrb[0].mxu0
    %v450 = vadd.f32 %v133, %v449
    %v451 = vpop.f32.mrb[0].mxu0
    %452 = vmatprep.mubr.bf16.mxu0 0
    %453 = vmatmul.mubr.bf16.gmra.mrb[0].mxu0 %v349
    %v454 = vpop.f32.mrb[0].mxu0
    %v455 = vadd.f32 %v138, %v454
    %v456 = vpop.f32.mrb[0].mxu0
    %v457 = vpop.f32.mrb[0].mxu0
    %v458 = vadd.f32 %v143, %v457
    %v459 = vpop.f32.mrb[0].mxu0
    %460 = vmatprep.mubr.bf16.mxu0 0
    %461 = vmatmul.mubr.bf16.gmra.mrb[0].mxu0 %v352
    %v462 = vpop.f32.mrb[0].mxu0
    %v463 = vadd.f32 %v148, %v462
    %v464 = vpop.f32.mrb[0].mxu0
    %v465 = vpop.f32.mrb[0].mxu0
    %v466 = vadd.f32 %v153, %v465
    %v467 = vpop.f32.mrb[0].mxu0
    %468 = vmatprep.mubr.bf16.mxu0 0
    %469 = vmatmul.mubr.bf16.gmra.mrb[0].mxu0 %v355
    %v470 = vpop.f32.mrb[0].mxu0
    %v471 = vadd.f32 %v158, %v470
    %v472 = vpop.f32.mrb[0].mxu0
    %v473 = vpop.f32.mrb[0].mxu0
    %v474 = vadd.f32 %v163, %v473
    %v475 = vpop.f32.mrb[0].mxu0
    %476 = vmatprep.mubr.bf16.mxu0 0
    %477 = vmatmul.mubr.bf16.gmra.mrb[0].mxu0 %v358
    %v478 = vpop.f32.mrb[0].mxu0
    %v479 = vadd.f32 %v168, %v478
    %v480 = vpop.f32.mrb[0].mxu0
    %v481 = vpop.f32.mrb[0].mxu0
    %v482 = vadd.f32 %v173, %v481
    %v483 = vpop.f32.mrb[0].mxu0
    %484 = vmatprep.mubr.bf16.mxu0 0
    %485 = vmatmul.mubr.bf16.gmra.mrb[0].mxu0 %v361
    %v486 = vpop.f32.mrb[0].mxu0
    %v487 = vadd.f32 %v178, %v486
    %v488 = vpop.f32.mrb[0].mxu0
    %v489 = vpop.f32.mrb[0].mxu0
    %v490 = vadd.f32 %v183, %v489
    %v491 = vpop.f32.mrb[0].mxu0
    %492 = vmatprep.mubr.bf16.mxu0 0
    %493 = vmatmul.mubr.bf16.gmra.mrb[0].mxu0 %v364
    %v494 = vpop.f32.mrb[0].mxu0
    %v495 = vadd.f32 %v188, %v494
    %v496 = vpop.f32.mrb[0].mxu0
    %v497 = vpop.f32.mrb[0].mxu0
    %v498 = vadd.f32 %v193, %v497
    %v499 = vpop.f32.mrb[0].mxu0
    %500 = vmatprep.mubr.bf16.mxu0 0
    %501 = vmatmul.mubr.bf16.gmra.mrb[0].mxu0 %v367
    %v502 = vpop.f32.mrb[0].mxu0
    %v503 = vadd.f32 %v198, %v502
    %v504 = vpop.f32.mrb[0].mxu0
    %v505 = vpop.f32.mrb[0].mxu0
    %v506 = vadd.f32 %v203, %v505
    %v507 = vpop.f32.mrb[0].mxu0
    %508 = vmatprep.mubr.bf16.mxu0 0
    %509 = vmatmul.mubr.bf16.gmra.mrb[0].mxu0 %v370
    %v510 = vpop.f32.mrb[0].mxu0
    %v511 = vadd.f32 %v208, %v510
    %v512 = vpop.f32.mrb[0].mxu0
    %v513 = vpop.f32.mrb[0].mxu0
    %v514 = vadd.f32 %v213, %v513
    %v515 = vpop.f32.mrb[0].mxu0
    %516 = vmatprep.mubr.bf16.mxu0 0
    %517 = vmatmul.mubr.bf16.gmra.mrb[0].mxu0 %v373
    %v518 = vpop.f32.mrb[0].mxu0
    %v519 = vadd.f32 %v218, %v518
    %v520 = vpop.f32.mrb[0].mxu0
    %v521 = vpop.f32.mrb[0].mxu0
    %v522 = vadd.f32 %v223, %v521
    %v523 = vpop.f32.mrb[0].mxu0
    %524 = vmatprep.mubr.bf16.mxu0 0
    %525 = vmatmul.mubr.bf16.gmra.mrb[0].mxu0 %v376
    %v526 = vpop.f32.mrb[0].mxu0
    %v527 = vadd.f32 %v228, %v526
    %v528 = vpop.f32.mrb[0].mxu0
    %v529 = vpop.f32.mrb[0].mxu0
    %v530 = vadd.f32 %v233, %v529
    %v531 = vpop.f32.mrb[0].mxu0
    %532 = vmatprep.mubr.bf16.mxu0 0
    %533 = vmatmul.mubr.bf16.gmra.mrb[0].mxu0 %v379
    %v534 = vpop.f32.mrb[0].mxu0
    %v535 = vadd.f32 %v238, %v534
    %v536 = vpop.f32.mrb[0].mxu0
    %v537 = vpop.f32.mrb[0].mxu0
    %v538 = vadd.f32 %v243, %v537
    %v539 = vpop.f32.mrb[0].mxu0
    %540 = vmatprep.mubr.bf16.mxu0 0
    %541 = vmatmul.mubr.bf16.gmra.mrb[0].mxu0 %v382
    %v542 = vpop.f32.mrb[0].mxu0
    %v543 = vadd.f32 %v248, %v542
    %v544 = vpop.f32.mrb[0].mxu0
    %v545 = vpop.f32.mrb[0].mxu0
    %v546 = vadd.f32 %v253, %v545
    %v547 = vpop.f32.mrb[0].mxu0
    %548 = vdwg.mxu0
    %v549 = vxor.u32 %v423, 2147483648
    %v550 = vxor.u32 %v426, 2147483648
    %v551 = vxor.u32 %v431, 2147483648
    %v552 = vxor.u32 %v434, 2147483648
    %v553 = vxor.u32 %v439, 2147483648
    %v554 = vxor.u32 %v442, 2147483648
    %v555 = vxor.u32 %v447, 2147483648
    %v556 = vxor.u32 %v450, 2147483648
    %v557 = vxor.u32 %v455, 2147483648
    %v558 = vxor.u32 %v458, 2147483648
    %v559 = vxor.u32 %v463, 2147483648
    %v560 = vxor.u32 %v466, 2147483648
    %v561 = vxor.u32 %v471, 2147483648
    %v562 = vxor.u32 %v474, 2147483648
    %v563 = vxor.u32 %v479, 2147483648
    %v564 = vxor.u32 %v482, 2147483648
    %v565 = vxor.u32 %v487, 2147483648
    %v566 = vxor.u32 %v490, 2147483648
    %v567 = vxor.u32 %v495, 2147483648
    %v568 = vxor.u32 %v498, 2147483648
    %v569 = vxor.u32 %v503, 2147483648
    %v570 = vxor.u32 %v506, 2147483648
    %v571 = vxor.u32 %v511, 2147483648
    %v572 = vxor.u32 %v514, 2147483648
    %v573 = vxor.u32 %v519, 2147483648
    %v574 = vxor.u32 %v522, 2147483648
    %v575 = vxor.u32 %v527, 2147483648
    %v576 = vxor.u32 %v530, 2147483648
    %v577 = vxor.u32 %v535, 2147483648
    %v578 = vxor.u32 %v538, 2147483648
    %v579 = vxor.u32 %v543, 2147483648
    %v580 = vxor.u32 %v546, 2147483648
    %v581 = vmul.f32 %v549, 1.442695
    %v582 = vpow.pop %v581
    %v583 = vmul.f32 %v550, 1.442695
    %v584 = vpow.pop %v583
    %v585 = vmul.f32 %v551, 1.442695
    %v586 = vpow.pop %v585
    %v587 = vmul.f32 %v552, 1.442695
    %v588 = vpow.pop %v587
    %v589 = vmul.f32 %v553, 1.442695
    %v590 = vpow.pop %v589
    %v591 = vmul.f32 %v554, 1.442695
    %v592 = vpow.pop %v591
    %v593 = vmul.f32 %v555, 1.442695
    %v594 = vpow.pop %v593
    %v595 = vmul.f32 %v556, 1.442695
    %v596 = vpow.pop %v595
    %v597 = vmul.f32 %v557, 1.442695
    %v598 = vpow.pop %v597
    %v599 = vmul.f32 %v558, 1.442695
    %v600 = vpow.pop %v599
    %v601 = vmul.f32 %v559, 1.442695
    %v602 = vpow.pop %v601
    %v603 = vmul.f32 %v560, 1.442695
    %v604 = vpow.pop %v603
    %v605 = vmul.f32 %v561, 1.442695
    %v606 = vpow.pop %v605
    %v607 = vmul.f32 %v562, 1.442695
    %v608 = vpow.pop %v607
    %v609 = vmul.f32 %v563, 1.442695
    %v610 = vpow.pop %v609
    %v611 = vmul.f32 %v564, 1.442695
    %v612 = vpow.pop %v611
    %v613 = vmul.f32 %v565, 1.442695
    %v614 = vpow.pop %v613
    %v615 = vmul.f32 %v566, 1.442695
    %v616 = vpow.pop %v615
    %v617 = vmul.f32 %v567, 1.442695
    %v618 = vpow.pop %v617
    %v619 = vmul.f32 %v568, 1.442695
    %v620 = vpow.pop %v619
    %v621 = vmul.f32 %v569, 1.442695
    %v622 = vpow.pop %v621
    %v623 = vmul.f32 %v570, 1.442695
    %v624 = vpow.pop %v623
    %v625 = vmul.f32 %v571, 1.442695
    %v626 = vpow.pop %v625
    %v627 = vmul.f32 %v572, 1.442695
    %v628 = vpow.pop %v627
    %v629 = vmul.f32 %v573, 1.442695
    %v630 = vpow.pop %v629
    %v631 = vmul.f32 %v574, 1.442695
    %v632 = vpow.pop %v631
    %v633 = vmul.f32 %v575, 1.442695
    %v634 = vpow.pop %v633
    %v635 = vmul.f32 %v576, 1.442695
    %v636 = vpow.pop %v635
    %v637 = vmul.f32 %v577, 1.442695
    %v638 = vpow.pop %v637
    %v639 = vmul.f32 %v578, 1.442695
    %v640 = vpow.pop %v639
    %v641 = vmul.f32 %v579, 1.442695
    %v642 = vpow.pop %v641
    %v643 = vmul.f32 %v580, 1.442695
    %v644 = vpow.pop %v643
    %v645 = vadd.f32 %v582, 1.0
    %v646 = vadd.f32 %v584, 1.0
    %v647 = vadd.f32 %v586, 1.0
    %v648 = vadd.f32 %v588, 1.0
    %v649 = vadd.f32 %v590, 1.0
    %v650 = vadd.f32 %v592, 1.0
    %v651 = vadd.f32 %v594, 1.0
    %v652 = vadd.f32 %v596, 1.0
    %v653 = vadd.f32 %v598, 1.0
    %v654 = vadd.f32 %v600, 1.0
    %v655 = vadd.f32 %v602, 1.0
    %v656 = vadd.f32 %v604, 1.0
    %v657 = vadd.f32 %v606, 1.0
    %v658 = vadd.f32 %v608, 1.0
    %v659 = vadd.f32 %v610, 1.0
    %v660 = vadd.f32 %v612, 1.0
    %v661 = vadd.f32 %v614, 1.0
    %v662 = vadd.f32 %v616, 1.0
    %v663 = vadd.f32 %v618, 1.0
    %v664 = vadd.f32 %v620, 1.0
    %v665 = vadd.f32 %v622, 1.0
    %v666 = vadd.f32 %v624, 1.0
    %v667 = vadd.f32 %v626, 1.0
    %v668 = vadd.f32 %v628, 1.0
    %v669 = vadd.f32 %v630, 1.0
    %v670 = vadd.f32 %v632, 1.0
    %v671 = vadd.f32 %v634, 1.0
    %v672 = vadd.f32 %v636, 1.0
    %v673 = vadd.f32 %v638, 1.0
    %v674 = vadd.f32 %v640, 1.0
    %v675 = vadd.f32 %v642, 1.0
    %v676 = vadd.f32 %v644, 1.0
    %v677 = vrcp.pop %v645
    %v678 = vmul.f32 1.0, %v677
    %v679 = vrcp.pop %v646
    %v680 = vmul.f32 1.0, %v679
    %v681 = vrcp.pop %v647
    %v682 = vmul.f32 1.0, %v681
    %v683 = vrcp.pop %v648
    %v684 = vmul.f32 1.0, %v683
    %v685 = vrcp.pop %v649
    %v686 = vmul.f32 1.0, %v685
    %v687 = vrcp.pop %v650
    %v688 = vmul.f32 1.0, %v687
    %v689 = vrcp.pop %v651
    %v690 = vmul.f32 1.0, %v689
    %v691 = vrcp.pop %v652
    %v692 = vmul.f32 1.0, %v691
    %v693 = vrcp.pop %v653
    %v694 = vmul.f32 1.0, %v693
    %v695 = vrcp.pop %v654
    %v696 = vmul.f32 1.0, %v695
    %v697 = vrcp.pop %v655
    %v698 = vmul.f32 1.0, %v697
    %v699 = vrcp.pop %v656
    %v700 = vmul.f32 1.0, %v699
    %v701 = vrcp.pop %v657
    %v702 = vmul.f32 1.0, %v701
    %v703 = vrcp.pop %v658
    %v704 = vmul.f32 1.0, %v703
    %v705 = vrcp.pop %v659
    %v706 = vmul.f32 1.0, %v705
    %v707 = vrcp.pop %v660
    %v708 = vmul.f32 1.0, %v707
    %v709 = vrcp.pop %v661
    %v710 = vmul.f32 1.0, %v709
    %v711 = vrcp.pop %v662
    %v712 = vmul.f32 1.0, %v711
    %v713 = vrcp.pop %v663
    %v714 = vmul.f32 1.0, %v713
    %v715 = vrcp.pop %v664
    %v716 = vmul.f32 1.0, %v715
    %v717 = vrcp.pop %v665
    %v718 = vmul.f32 1.0, %v717
    %v719 = vrcp.pop %v666
    %v720 = vmul.f32 1.0, %v719
    %v721 = vrcp.pop %v667
    %v722 = vmul.f32 1.0, %v721
    %v723 = vrcp.pop %v668
    %v724 = vmul.f32 1.0, %v723
    %v725 = vrcp.pop %v669
    %v726 = vmul.f32 1.0, %v725
    %v727 = vrcp.pop %v670
    %v728 = vmul.f32 1.0, %v727
    %v729 = vrcp.pop %v671
    %v730 = vmul.f32 1.0, %v729
    %v731 = vrcp.pop %v672
    %v732 = vmul.f32 1.0, %v731
    %v733 = vrcp.pop %v673
    %v734 = vmul.f32 1.0, %v733
    %v735 = vrcp.pop %v674
    %v736 = vmul.f32 1.0, %v735
    %v737 = vrcp.pop %v675
    %v738 = vmul.f32 1.0, %v737
    %v739 = vrcp.pop %v676
    %v740 = vmul.f32 1.0, %v739
    %v741 = vld [vmem:[%s3] sm:$0xff]
    %v742 = vld [vmem:[%s3 + $0x8] sm:$0xff]
    %v743 = vld [vmem:[%s3 + $0x10] sm:$0xff]
    %v744 = vld [vmem:[%s3 + $0x18] sm:$0xff]
    %v745 = vld [vmem:[%s3 + $0x20] sm:$0xff]
    %v746 = vld [vmem:[%s3 + $0x28] sm:$0xff]
    %v747 = vld [vmem:[%s3 + $0x30] sm:$0xff]
    %v748 = vld [vmem:[%s3 + $0x38] sm:$0xff]
    %v749 = vld [vmem:[%s3 + $0x40] sm:$0xff]
    %v750 = vld [vmem:[%s3 + $0x48] sm:$0xff]
    %v751 = vld [vmem:[%s3 + $0x50] sm:$0xff]
    %v752 = vld [vmem:[%s3 + $0x58] sm:$0xff]
    %v753 = vld [vmem:[%s3 + $0x60] sm:$0xff]
    %v754 = vld [vmem:[%s3 + $0x68] sm:$0xff]
    %v755 = vld [vmem:[%s3 + $0x70] sm:$0xff]
    %v756 = vld [vmem:[%s3 + $0x78] sm:$0xff]
    %v757 = vld [vmem:[%s3 + $0x80] sm:$0xff]
    %v758 = vld [vmem:[%s3 + $0x88] sm:$0xff]
    %v759 = vld [vmem:[%s3 + $0x90] sm:$0xff]
    %v760 = vld [vmem:[%s3 + $0x98] sm:$0xff]
    %v761 = vld [vmem:[%s3 + $0xa0] sm:$0xff]
    %v762 = vld [vmem:[%s3 + $0xa8] sm:$0xff]
    %v763 = vld [vmem:[%s3 + $0xb0] sm:$0xff]
    %v764 = vld [vmem:[%s3 + $0xb8] sm:$0xff]
    %v765 = vld [vmem:[%s3 + $0xc0] sm:$0xff]
    %v766 = vld [vmem:[%s3 + $0xc8] sm:$0xff]
    %v767 = vld [vmem:[%s3 + $0xd0] sm:$0xff]
    %v768 = vld [vmem:[%s3 + $0xd8] sm:$0xff]
    %v769 = vld [vmem:[%s3 + $0xe0] sm:$0xff]
    %v770 = vld [vmem:[%s3 + $0xe8] sm:$0xff]
    %v771 = vld [vmem:[%s3 + $0xf0] sm:$0xff]
    %v772 = vld [vmem:[%s3 + $0xf8] sm:$0xff]
    %v773 = vpack.c.bf16 %v680, %v678
    %v774 = vpack.c.bf16 %v684, %v682
    %v775 = vpack.c.bf16 %v688, %v686
    %v776 = vpack.c.bf16 %v692, %v690
    %v777 = vpack.c.bf16 %v696, %v694
    %v778 = vpack.c.bf16 %v700, %v698
    %v779 = vpack.c.bf16 %v704, %v702
    %v780 = vpack.c.bf16 %v708, %v706
    %v781 = vpack.c.bf16 %v712, %v710
    %v782 = vpack.c.bf16 %v716, %v714
    %v783 = vpack.c.bf16 %v720, %v718
    %v784 = vpack.c.bf16 %v724, %v722
    %v785 = vpack.c.bf16 %v728, %v726
    %v786 = vpack.c.bf16 %v732, %v730
    %v787 = vpack.c.bf16 %v736, %v734
    %v788 = vpack.c.bf16 %v740, %v738
    %v789 = vld [vmem:[%s4] sm:$0xff]
    %v790 = vld [vmem:[%s4 + $0x8] sm:$0xff]
    %v791 = vld [vmem:[%s4 + $0x10] sm:$0xff]
    %v792 = vld [vmem:[%s4 + $0x18] sm:$0xff]
    %v793 = vld [vmem:[%s4 + $0x20] sm:$0xff]
    %v794 = vld [vmem:[%s4 + $0x28] sm:$0xff]
    %v795 = vld [vmem:[%s4 + $0x30] sm:$0xff]
    %v796 = vld [vmem:[%s4 + $0x38] sm:$0xff]
    %v797 = vld [vmem:[%s4 + $0x40] sm:$0xff]
    %v798 = vld [vmem:[%s4 + $0x48] sm:$0xff]
    %v799 = vld [vmem:[%s4 + $0x50] sm:$0xff]
    %v800 = vld [vmem:[%s4 + $0x58] sm:$0xff]
    %v801 = vld [vmem:[%s4 + $0x60] sm:$0xff]
    %v802 = vld [vmem:[%s4 + $0x68] sm:$0xff]
    %v803 = vld [vmem:[%s4 + $0x70] sm:$0xff]
    %v804 = vld [vmem:[%s4 + $0x78] sm:$0xff]
    %v805 = vld [vmem:[%s4 + $0x80] sm:$0xff]
    %v806 = vld [vmem:[%s4 + $0x88] sm:$0xff]
    %v807 = vld [vmem:[%s4 + $0x90] sm:$0xff]
    %v808 = vld [vmem:[%s4 + $0x98] sm:$0xff]
    %v809 = vld [vmem:[%s4 + $0xa0] sm:$0xff]
    %v810 = vld [vmem:[%s4 + $0xa8] sm:$0xff]
    %v811 = vld [vmem:[%s4 + $0xb0] sm:$0xff]
    %v812 = vld [vmem:[%s4 + $0xb8] sm:$0xff]
    %v813 = vld [vmem:[%s4 + $0xc0] sm:$0xff]
    %v814 = vld [vmem:[%s4 + $0xc8] sm:$0xff]
    %v815 = vld [vmem:[%s4 + $0xd0] sm:$0xff]
    %v816 = vld [vmem:[%s4 + $0xd8] sm:$0xff]
    %v817 = vld [vmem:[%s4 + $0xe0] sm:$0xff]
    %v818 = vld [vmem:[%s4 + $0xe8] sm:$0xff]
    %v819 = vld [vmem:[%s4 + $0xf0] sm:$0xff]
    %v820 = vld [vmem:[%s4 + $0xf8] sm:$0xff]
    %822 = vset.pattern.permute.xlu0 0
    %823 = vperm.xlu0 %822, %v789
    %v824 = vpop.permute.xlu0 %823
    %827 = vset.pattern.permute.xlu0 0
    %828 = vperm.xlu0 %827, %v790
    %v829 = vpop.permute.xlu0 %828
    %832 = vset.pattern.permute.xlu0 0
    %833 = vperm.xlu0 %832, %v791
    %v834 = vpop.permute.xlu0 %833
    %837 = vset.pattern.permute.xlu0 0
    %838 = vperm.xlu0 %837, %v792
    %v839 = vpop.permute.xlu0 %838
    %842 = vset.pattern.permute.xlu0 0
    %843 = vperm.xlu0 %842, %v793
    %v844 = vpop.permute.xlu0 %843
    %847 = vset.pattern.permute.xlu0 0
    %848 = vperm.xlu0 %847, %v794
    %v849 = vpop.permute.xlu0 %848
    %852 = vset.pattern.permute.xlu0 0
    %853 = vperm.xlu0 %852, %v795
    %v854 = vpop.permute.xlu0 %853
    %857 = vset.pattern.permute.xlu0 0
    %858 = vperm.xlu0 %857, %v796
    %v859 = vpop.permute.xlu0 %858
    %862 = vset.pattern.permute.xlu0 0
    %863 = vperm.xlu0 %862, %v797
    %v864 = vpop.permute.xlu0 %863
    %867 = vset.pattern.permute.xlu0 0
    %868 = vperm.xlu0 %867, %v798
    %v869 = vpop.permute.xlu0 %868
    %872 = vset.pattern.permute.xlu0 0
    %873 = vperm.xlu0 %872, %v799
    %v874 = vpop.permute.xlu0 %873
    %877 = vset.pattern.permute.xlu0 0
    %878 = vperm.xlu0 %877, %v800
    %v879 = vpop.permute.xlu0 %878
    %882 = vset.pattern.permute.xlu0 0
    %883 = vperm.xlu0 %882, %v801
    %v884 = vpop.permute.xlu0 %883
    %887 = vset.pattern.permute.xlu0 0
    %888 = vperm.xlu0 %887, %v802
    %v889 = vpop.permute.xlu0 %888
    %892 = vset.pattern.permute.xlu0 0
    %893 = vperm.xlu0 %892, %v803
    %v894 = vpop.permute.xlu0 %893
    %897 = vset.pattern.permute.xlu0 0
    %898 = vperm.xlu0 %897, %v804
    %v899 = vpop.permute.xlu0 %898
    %902 = vset.pattern.permute.xlu0 0
    %903 = vperm.xlu0 %902, %v805
    %v904 = vpop.permute.xlu0 %903
    %907 = vset.pattern.permute.xlu0 0
    %908 = vperm.xlu0 %907, %v806
    %v909 = vpop.permute.xlu0 %908
    %912 = vset.pattern.permute.xlu0 0
    %913 = vperm.xlu0 %912, %v807
    %v914 = vpop.permute.xlu0 %913
    %917 = vset.pattern.permute.xlu0 0
    %918 = vperm.xlu0 %917, %v808
    %v919 = vpop.permute.xlu0 %918
    %922 = vset.pattern.permute.xlu0 0
    %923 = vperm.xlu0 %922, %v809
    %v924 = vpop.permute.xlu0 %923
    %927 = vset.pattern.permute.xlu0 0
    %928 = vperm.xlu0 %927, %v810
    %v929 = vpop.permute.xlu0 %928
    %932 = vset.pattern.permute.xlu0 0
    %933 = vperm.xlu0 %932, %v811
    %v934 = vpop.permute.xlu0 %933
    %937 = vset.pattern.permute.xlu0 0
    %938 = vperm.xlu0 %937, %v812
    %v939 = vpop.permute.xlu0 %938
    %942 = vset.pattern.permute.xlu0 0
    %943 = vperm.xlu0 %942, %v813
    %v944 = vpop.permute.xlu0 %943
    %947 = vset.pattern.permute.xlu0 0
    %948 = vperm.xlu0 %947, %v814
    %v949 = vpop.permute.xlu0 %948
    %952 = vset.pattern.permute.xlu0 0
    %953 = vperm.xlu0 %952, %v815
    %v954 = vpop.permute.xlu0 %953
    %957 = vset.pattern.permute.xlu0 0
    %958 = vperm.xlu0 %957, %v816
    %v959 = vpop.permute.xlu0 %958
    %962 = vset.pattern.permute.xlu0 0
    %963 = vperm.xlu0 %962, %v817
    %v964 = vpop.permute.xlu0 %963
    %967 = vset.pattern.permute.xlu0 0
    %968 = vperm.xlu0 %967, %v818
    %v969 = vpop.permute.xlu0 %968
    %972 = vset.pattern.permute.xlu0 0
    %973 = vperm.xlu0 %972, %v819
    %v974 = vpop.permute.xlu0 %973
    %977 = vset.pattern.permute.xlu0 0
    %978 = vperm.xlu0 %977, %v820
    %v979 = vpop.permute.xlu0 %978
    %v1013 = vunpack.c.l.b16 %v741
    %v1014 = vunpack.c.h.b16 %v741
    %v1015 = vunpack.c.l.b16 %v742
    %v1016 = vunpack.c.h.b16 %v742
    %v1017 = vunpack.c.l.b16 %v743
    %v1018 = vunpack.c.h.b16 %v743
    %v1019 = vunpack.c.l.b16 %v744
    %v1020 = vunpack.c.h.b16 %v744
    %v1021 = vunpack.c.l.b16 %v745
    %v1022 = vunpack.c.h.b16 %v745
    %v1023 = vunpack.c.l.b16 %v746
    %v1024 = vunpack.c.h.b16 %v746
    %v1025 = vunpack.c.l.b16 %v747
    %v1026 = vunpack.c.h.b16 %v747
    %v1027 = vunpack.c.l.b16 %v748
    %v1028 = vunpack.c.h.b16 %v748
    %v1029 = vunpack.c.l.b16 %v749
    %v1030 = vunpack.c.h.b16 %v749
    %v1031 = vunpack.c.l.b16 %v750
    %v1032 = vunpack.c.h.b16 %v750
    %v1033 = vunpack.c.l.b16 %v751
    %v1034 = vunpack.c.h.b16 %v751
    %v1035 = vunpack.c.l.b16 %v752
    %v1036 = vunpack.c.h.b16 %v752
    %v1037 = vunpack.c.l.b16 %v753
    %v1038 = vunpack.c.h.b16 %v753
    %v1039 = vunpack.c.l.b16 %v754
    %v1040 = vunpack.c.h.b16 %v754
    %v1041 = vunpack.c.l.b16 %v755
    %v1042 = vunpack.c.h.b16 %v755
    %v1043 = vunpack.c.l.b16 %v756
    %v1044 = vunpack.c.h.b16 %v756
    %v1045 = vunpack.c.l.b16 %v757
    %v1046 = vunpack.c.h.b16 %v757
    %v1047 = vunpack.c.l.b16 %v758
    %v1048 = vunpack.c.h.b16 %v758
    %v1049 = vunpack.c.l.b16 %v759
    %v1050 = vunpack.c.h.b16 %v759
    %v1051 = vunpack.c.l.b16 %v760
    %v1052 = vunpack.c.h.b16 %v760
    %v1053 = vunpack.c.l.b16 %v761
    %v1054 = vunpack.c.h.b16 %v761
    %v1055 = vunpack.c.l.b16 %v762
    %v1056 = vunpack.c.h.b16 %v762
    %v1057 = vunpack.c.l.b16 %v763
    %v1058 = vunpack.c.h.b16 %v763
    %v1059 = vunpack.c.l.b16 %v764
    %v1060 = vunpack.c.h.b16 %v764
    %v1061 = vunpack.c.l.b16 %v765
    %v1062 = vunpack.c.h.b16 %v765
    %v1063 = vunpack.c.l.b16 %v766
    %v1064 = vunpack.c.h.b16 %v766
    %v1065 = vunpack.c.l.b16 %v767
    %v1066 = vunpack.c.h.b16 %v767
    %v1067 = vunpack.c.l.b16 %v768
    %v1068 = vunpack.c.h.b16 %v768
    %v1069 = vunpack.c.l.b16 %v769
    %v1070 = vunpack.c.h.b16 %v769
    %v1071 = vunpack.c.l.b16 %v770
    %v1072 = vunpack.c.h.b16 %v770
    %v1073 = vunpack.c.l.b16 %v771
    %v1074 = vunpack.c.h.b16 %v771
    %v1075 = vunpack.c.l.b16 %v772
    %v1076 = vunpack.c.h.b16 %v772
    %v1077 = vpack.c.b16 %v1015, %v1013
    %v1078 = vpack.c.b16 %v1016, %v1014
    %v1079 = vpack.c.b16 %v1019, %v1017
    %v1080 = vpack.c.b16 %v1020, %v1018
    %v1081 = vpack.c.b16 %v1023, %v1021
    %v1082 = vpack.c.b16 %v1024, %v1022
    %v1083 = vpack.c.b16 %v1027, %v1025
    %v1084 = vpack.c.b16 %v1028, %v1026
    %v1085 = vpack.c.b16 %v1031, %v1029
    %v1086 = vpack.c.b16 %v1032, %v1030
    %v1087 = vpack.c.b16 %v1035, %v1033
    %v1088 = vpack.c.b16 %v1036, %v1034
    %v1089 = vpack.c.b16 %v1039, %v1037
    %v1090 = vpack.c.b16 %v1040, %v1038
    %v1091 = vpack.c.b16 %v1043, %v1041
    %v1092 = vpack.c.b16 %v1044, %v1042
    %v1093 = vpack.c.b16 %v1047, %v1045
    %v1094 = vpack.c.b16 %v1048, %v1046
    %v1095 = vpack.c.b16 %v1051, %v1049
    %v1096 = vpack.c.b16 %v1052, %v1050
    %v1097 = vpack.c.b16 %v1055, %v1053
    %v1098 = vpack.c.b16 %v1056, %v1054
    %v1099 = vpack.c.b16 %v1059, %v1057
    %v1100 = vpack.c.b16 %v1060, %v1058
    %v1101 = vpack.c.b16 %v1063, %v1061
    %v1102 = vpack.c.b16 %v1064, %v1062
    %v1103 = vpack.c.b16 %v1067, %v1065
    %v1104 = vpack.c.b16 %v1068, %v1066
    %v1105 = vpack.c.b16 %v1071, %v1069
    %v1106 = vpack.c.b16 %v1072, %v1070
    %v1107 = vpack.c.b16 %v1075, %v1073
    %v1108 = vpack.c.b16 %v1076, %v1074
    %1141 = vmatprep.subr.bf16.mxu0 0
    %1142 = vmatpush1.bf16.msra.mxu0 %v773
    %1143 = vmatprep.subr.bf16.mxu0 0
    %1144 = vmatpush1.bf16.msra.mxu0 %v774
    %1145 = vmatprep.subr.bf16.mxu0 0
    %1146 = vmatpush1.bf16.msra.mxu0 %v775
    %1147 = vmatprep.subr.bf16.mxu0 0
    %1148 = vmatpush1.bf16.msra.mxu0 %v776
    %1149 = vmatprep.subr.bf16.mxu0 0
    %1150 = vmatpush1.bf16.msra.mxu0 %v777
    %1151 = vmatprep.subr.bf16.mxu0 0
    %1152 = vmatpush1.bf16.msra.mxu0 %v778
    %1153 = vmatprep.subr.bf16.mxu0 0
    %1154 = vmatpush1.bf16.msra.mxu0 %v779
    %1155 = vmatprep.subr.bf16.mxu0 0
    %1156 = vmatpush1.bf16.msra.mxu0 %v780
    %1157 = vmatprep.subr.bf16.mxu0 0
    %1158 = vmatpush1.bf16.msra.mxu0 %v781
    %1159 = vmatprep.subr.bf16.mxu0 0
    %1160 = vmatpush1.bf16.msra.mxu0 %v782
    %1161 = vmatprep.subr.bf16.mxu0 0
    %1162 = vmatpush1.bf16.msra.mxu0 %v783
    %1163 = vmatprep.subr.bf16.mxu0 0
    %1164 = vmatpush1.bf16.msra.mxu0 %v784
    %1165 = vmatprep.subr.bf16.mxu0 0
    %1166 = vmatpush1.bf16.msra.mxu0 %v785
    %1167 = vmatprep.subr.bf16.mxu0 0
    %1168 = vmatpush1.bf16.msra.mxu0 %v786
    %1169 = vmatprep.subr.bf16.mxu0 0
    %1170 = vmatpush1.bf16.msra.mxu0 %v787
    %1171 = vmatprep.subr.bf16.mxu0 0
    %1172 = vmatpush1.bf16.msra.mxu0 %v788
    %1173 = vmatprep.mubr.bf16.mxu0 %v1078
    %1174 = vmatmul.mubr.bf16.gmra.mrb[0].mxu0 %v1077
    %v1175 = vpop.f32.mrb[0].mxu0
    %v1176 = vadd.f32 %v824, %v1175
    %v1177 = vpop.f32.mrb[0].mxu0
    %v1178 = vpop.f32.mrb[0].mxu0
    %v1179 = vadd.f32 %v829, %v1178
    %v1180 = vpop.f32.mrb[0].mxu0
    %1181 = vmatprep.mubr.bf16.mxu0 %v1080
    %1182 = vmatmul.mubr.bf16.gmra.mrb[0].mxu0 %v1079
    %v1183 = vpop.f32.mrb[0].mxu0
    %v1184 = vadd.f32 %v834, %v1183
    %v1185 = vpop.f32.mrb[0].mxu0
    %v1186 = vpop.f32.mrb[0].mxu0
    %v1187 = vadd.f32 %v839, %v1186
    %v1188 = vpop.f32.mrb[0].mxu0
    %1189 = vmatprep.mubr.bf16.mxu0 %v1082
    %1190 = vmatmul.mubr.bf16.gmra.mrb[0].mxu0 %v1081
    %v1191 = vpop.f32.mrb[0].mxu0
    %v1192 = vadd.f32 %v844, %v1191
    %v1193 = vpop.f32.mrb[0].mxu0
    %v1194 = vpop.f32.mrb[0].mxu0
    %v1195 = vadd.f32 %v849, %v1194
    %v1196 = vpop.f32.mrb[0].mxu0
    %1197 = vmatprep.mubr.bf16.mxu0 %v1084
    %1198 = vmatmul.mubr.bf16.gmra.mrb[0].mxu0 %v1083
    %v1199 = vpop.f32.mrb[0].mxu0
    %v1200 = vadd.f32 %v854, %v1199
    %v1201 = vpop.f32.mrb[0].mxu0
    %v1202 = vpop.f32.mrb[0].mxu0
    %v1203 = vadd.f32 %v859, %v1202
    %v1204 = vpop.f32.mrb[0].mxu0
    %1205 = vmatprep.mubr.bf16.mxu0 %v1086
    %1206 = vmatmul.mubr.bf16.gmra.mrb[0].mxu0 %v1085
    %v1207 = vpop.f32.mrb[0].mxu0
    %v1208 = vadd.f32 %v864, %v1207
    %v1209 = vpop.f32.mrb[0].mxu0
    %v1210 = vpop.f32.mrb[0].mxu0
    %v1211 = vadd.f32 %v869, %v1210
    %v1212 = vpop.f32.mrb[0].mxu0
    %1213 = vmatprep.mubr.bf16.mxu0 %v1088
    %1214 = vmatmul.mubr.bf16.gmra.mrb[0].mxu0 %v1087
    %v1215 = vpop.f32.mrb[0].mxu0
    %v1216 = vadd.f32 %v874, %v1215
    %v1217 = vpop.f32.mrb[0].mxu0
    %v1218 = vpop.f32.mrb[0].mxu0
    %v1219 = vadd.f32 %v879, %v1218
    %v1220 = vpop.f32.mrb[0].mxu0
    %1221 = vmatprep.mubr.bf16.mxu0 %v1090
    %1222 = vmatmul.mubr.bf16.gmra.mrb[0].mxu0 %v1089
    %v1223 = vpop.f32.mrb[0].mxu0
    %v1224 = vadd.f32 %v884, %v1223
    %v1225 = vpop.f32.mrb[0].mxu0
    %v1226 = vpop.f32.mrb[0].mxu0
    %v1227 = vadd.f32 %v889, %v1226
    %v1228 = vpop.f32.mrb[0].mxu0
    %1229 = vmatprep.mubr.bf16.mxu0 %v1092
    %1230 = vmatmul.mubr.bf16.gmra.mrb[0].mxu0 %v1091
    %v1231 = vpop.f32.mrb[0].mxu0
    %v1232 = vadd.f32 %v894, %v1231
    %v1233 = vpop.f32.mrb[0].mxu0
    %v1234 = vpop.f32.mrb[0].mxu0
    %v1235 = vadd.f32 %v899, %v1234
    %v1236 = vpop.f32.mrb[0].mxu0
    %1237 = vmatprep.mubr.bf16.mxu0 %v1094
    %1238 = vmatmul.mubr.bf16.gmra.mrb[0].mxu0 %v1093
    %v1239 = vpop.f32.mrb[0].mxu0
    %v1240 = vadd.f32 %v904, %v1239
    %v1241 = vpop.f32.mrb[0].mxu0
    %v1242 = vpop.f32.mrb[0].mxu0
    %v1243 = vadd.f32 %v909, %v1242
    %v1244 = vpop.f32.mrb[0].mxu0
    %1245 = vmatprep.mubr.bf16.mxu0 %v1096
    %1246 = vmatmul.mubr.bf16.gmra.mrb[0].mxu0 %v1095
    %v1247 = vpop.f32.mrb[0].mxu0
    %v1248 = vadd.f32 %v914, %v1247
    %v1249 = vpop.f32.mrb[0].mxu0
    %v1250 = vpop.f32.mrb[0].mxu0
    %v1251 = vadd.f32 %v919, %v1250
    %v1252 = vpop.f32.mrb[0].mxu0
    %1253 = vmatprep.mubr.bf16.mxu0 %v1098
    %1254 = vmatmul.mubr.bf16.gmra.mrb[0].mxu0 %v1097
    %v1255 = vpop.f32.mrb[0].mxu0
    %v1256 = vadd.f32 %v924, %v1255
    %v1257 = vpop.f32.mrb[0].mxu0
    %v1258 = vpop.f32.mrb[0].mxu0
    %v1259 = vadd.f32 %v929, %v1258
    %v1260 = vpop.f32.mrb[0].mxu0
    %1261 = vmatprep.mubr.bf16.mxu0 %v1100
    %1262 = vmatmul.mubr.bf16.gmra.mrb[0].mxu0 %v1099
    %v1263 = vpop.f32.mrb[0].mxu0
    %v1264 = vadd.f32 %v934, %v1263
    %v1265 = vpop.f32.mrb[0].mxu0
    %v1266 = vpop.f32.mrb[0].mxu0
    %v1267 = vadd.f32 %v939, %v1266
    %v1268 = vpop.f32.mrb[0].mxu0
    %1269 = vmatprep.mubr.bf16.mxu0 %v1102
    %1270 = vmatmul.mubr.bf16.gmra.mrb[0].mxu0 %v1101
    %v1271 = vpop.f32.mrb[0].mxu0
    %v1272 = vadd.f32 %v944, %v1271
    %v1273 = vpop.f32.mrb[0].mxu0
    %v1274 = vpop.f32.mrb[0].mxu0
    %v1275 = vadd.f32 %v949, %v1274
    %v1276 = vpop.f32.mrb[0].mxu0
    %1277 = vmatprep.mubr.bf16.mxu0 %v1104
    %1278 = vmatmul.mubr.bf16.gmra.mrb[0].mxu0 %v1103
    %v1279 = vpop.f32.mrb[0].mxu0
    %v1280 = vadd.f32 %v954, %v1279
    %v1281 = vpop.f32.mrb[0].mxu0
    %v1282 = vpop.f32.mrb[0].mxu0
    %v1283 = vadd.f32 %v959, %v1282
    %v1284 = vpop.f32.mrb[0].mxu0
    %1285 = vmatprep.mubr.bf16.mxu0 %v1106
    %1286 = vmatmul.mubr.bf16.gmra.mrb[0].mxu0 %v1105
    %v1287 = vpop.f32.mrb[0].mxu0
    %v1288 = vadd.f32 %v964, %v1287
    %v1289 = vpop.f32.mrb[0].mxu0
    %v1290 = vpop.f32.mrb[0].mxu0
    %v1291 = vadd.f32 %v969, %v1290
    %v1292 = vpop.f32.mrb[0].mxu0
    %1293 = vmatprep.mubr.bf16.mxu0 %v1108
    %1294 = vmatmul.mubr.bf16.gmra.mrb[0].mxu0 %v1107
    %v1295 = vpop.f32.mrb[0].mxu0
    %v1296 = vadd.f32 %v974, %v1295
    %v1297 = vpop.f32.mrb[0].mxu0
    %v1298 = vpop.f32.mrb[0].mxu0
    %v1299 = vadd.f32 %v979, %v1298
    %v1300 = vpop.f32.mrb[0].mxu0
    %1301 = vdwg.mxu0
    %v1302 = vxor.u32 %v1176, 2147483648
    %v1303 = vxor.u32 %v1179, 2147483648
    %v1304 = vxor.u32 %v1184, 2147483648
    %v1305 = vxor.u32 %v1187, 2147483648
    %v1306 = vxor.u32 %v1192, 2147483648
    %v1307 = vxor.u32 %v1195, 2147483648
    %v1308 = vxor.u32 %v1200, 2147483648
    %v1309 = vxor.u32 %v1203, 2147483648
    %v1310 = vxor.u32 %v1208, 2147483648
    %v1311 = vxor.u32 %v1211, 2147483648
    %v1312 = vxor.u32 %v1216, 2147483648
    %v1313 = vxor.u32 %v1219, 2147483648
    %v1314 = vxor.u32 %v1224, 2147483648
    %v1315 = vxor.u32 %v1227, 2147483648
    %v1316 = vxor.u32 %v1232, 2147483648
    %v1317 = vxor.u32 %v1235, 2147483648
    %v1318 = vxor.u32 %v1240, 2147483648
    %v1319 = vxor.u32 %v1243, 2147483648
    %v1320 = vxor.u32 %v1248, 2147483648
    %v1321 = vxor.u32 %v1251, 2147483648
    %v1322 = vxor.u32 %v1256, 2147483648
    %v1323 = vxor.u32 %v1259, 2147483648
    %v1324 = vxor.u32 %v1264, 2147483648
    %v1325 = vxor.u32 %v1267, 2147483648
    %v1326 = vxor.u32 %v1272, 2147483648
    %v1327 = vxor.u32 %v1275, 2147483648
    %v1328 = vxor.u32 %v1280, 2147483648
    %v1329 = vxor.u32 %v1283, 2147483648
    %v1330 = vxor.u32 %v1288, 2147483648
    %v1331 = vxor.u32 %v1291, 2147483648
    %v1332 = vxor.u32 %v1296, 2147483648
    %v1333 = vxor.u32 %v1299, 2147483648
    %v1334 = vmul.f32 %v1302, 1.442695
    %v1335 = vpow.pop %v1334
    %v1336 = vmul.f32 %v1303, 1.442695
    %v1337 = vpow.pop %v1336
    %v1338 = vmul.f32 %v1304, 1.442695
    %v1339 = vpow.pop %v1338
    %v1340 = vmul.f32 %v1305, 1.442695
    %v1341 = vpow.pop %v1340
    %v1342 = vmul.f32 %v1306, 1.442695
    %v1343 = vpow.pop %v1342
    %v1344 = vmul.f32 %v1307, 1.442695
    %v1345 = vpow.pop %v1344
    %v1346 = vmul.f32 %v1308, 1.442695
    %v1347 = vpow.pop %v1346
    %v1348 = vmul.f32 %v1309, 1.442695
    %v1349 = vpow.pop %v1348
    %v1350 = vmul.f32 %v1310, 1.442695
    %v1351 = vpow.pop %v1350
    %v1352 = vmul.f32 %v1311, 1.442695
    %v1353 = vpow.pop %v1352
    %v1354 = vmul.f32 %v1312, 1.442695
    %v1355 = vpow.pop %v1354
    %v1356 = vmul.f32 %v1313, 1.442695
    %v1357 = vpow.pop %v1356
    %v1358 = vmul.f32 %v1314, 1.442695
    %v1359 = vpow.pop %v1358
    %v1360 = vmul.f32 %v1315, 1.442695
    %v1361 = vpow.pop %v1360
    %v1362 = vmul.f32 %v1316, 1.442695
    %v1363 = vpow.pop %v1362
    %v1364 = vmul.f32 %v1317, 1.442695
    %v1365 = vpow.pop %v1364
    %v1366 = vmul.f32 %v1318, 1.442695
    %v1367 = vpow.pop %v1366
    %v1368 = vmul.f32 %v1319, 1.442695
    %v1369 = vpow.pop %v1368
    %v1370 = vmul.f32 %v1320, 1.442695
    %v1371 = vpow.pop %v1370
    %v1372 = vmul.f32 %v1321, 1.442695
    %v1373 = vpow.pop %v1372
    %v1374 = vmul.f32 %v1322, 1.442695
    %v1375 = vpow.pop %v1374
    %v1376 = vmul.f32 %v1323, 1.442695
    %v1377 = vpow.pop %v1376
    %v1378 = vmul.f32 %v1324, 1.442695
    %v1379 = vpow.pop %v1378
    %v1380 = vmul.f32 %v1325, 1.442695
    %v1381 = vpow.pop %v1380
    %v1382 = vmul.f32 %v1326, 1.442695
    %v1383 = vpow.pop %v1382
    %v1384 = vmul.f32 %v1327, 1.442695
    %v1385 = vpow.pop %v1384
    %v1386 = vmul.f32 %v1328, 1.442695
    %v1387 = vpow.pop %v1386
    %v1388 = vmul.f32 %v1329, 1.442695
    %v1389 = vpow.pop %v1388
    %v1390 = vmul.f32 %v1330, 1.442695
    %v1391 = vpow.pop %v1390
    %v1392 = vmul.f32 %v1331, 1.442695
    %v1393 = vpow.pop %v1392
    %v1394 = vmul.f32 %v1332, 1.442695
    %v1395 = vpow.pop %v1394
    %v1396 = vmul.f32 %v1333, 1.442695
    %v1397 = vpow.pop %v1396
    %v1398 = vadd.f32 %v1335, 1.0
    %v1399 = vadd.f32 %v1337, 1.0
    %v1400 = vadd.f32 %v1339, 1.0
    %v1401 = vadd.f32 %v1341, 1.0
    %v1402 = vadd.f32 %v1343, 1.0
    %v1403 = vadd.f32 %v1345, 1.0
    %v1404 = vadd.f32 %v1347, 1.0
    %v1405 = vadd.f32 %v1349, 1.0
    %v1406 = vadd.f32 %v1351, 1.0
    %v1407 = vadd.f32 %v1353, 1.0
    %v1408 = vadd.f32 %v1355, 1.0
    %v1409 = vadd.f32 %v1357, 1.0
    %v1410 = vadd.f32 %v1359, 1.0
    %v1411 = vadd.f32 %v1361, 1.0
    %v1412 = vadd.f32 %v1363, 1.0
    %v1413 = vadd.f32 %v1365, 1.0
    %v1414 = vadd.f32 %v1367, 1.0
    %v1415 = vadd.f32 %v1369, 1.0
    %v1416 = vadd.f32 %v1371, 1.0
    %v1417 = vadd.f32 %v1373, 1.0
    %v1418 = vadd.f32 %v1375, 1.0
    %v1419 = vadd.f32 %v1377, 1.0
    %v1420 = vadd.f32 %v1379, 1.0
    %v1421 = vadd.f32 %v1381, 1.0
    %v1422 = vadd.f32 %v1383, 1.0
    %v1423 = vadd.f32 %v1385, 1.0
    %v1424 = vadd.f32 %v1387, 1.0
    %v1425 = vadd.f32 %v1389, 1.0
    %v1426 = vadd.f32 %v1391, 1.0
    %v1427 = vadd.f32 %v1393, 1.0
    %v1428 = vadd.f32 %v1395, 1.0
    %v1429 = vadd.f32 %v1397, 1.0
    %v1430 = vrcp.pop %v1398
    %v1431 = vmul.f32 1.0, %v1430
    %v1432 = vrcp.pop %v1399
    %v1433 = vmul.f32 1.0, %v1432
    %v1434 = vrcp.pop %v1400
    %v1435 = vmul.f32 1.0, %v1434
    %v1436 = vrcp.pop %v1401
    %v1437 = vmul.f32 1.0, %v1436
    %v1438 = vrcp.pop %v1402
    %v1439 = vmul.f32 1.0, %v1438
    %v1440 = vrcp.pop %v1403
    %v1441 = vmul.f32 1.0, %v1440
    %v1442 = vrcp.pop %v1404
    %v1443 = vmul.f32 1.0, %v1442
    %v1444 = vrcp.pop %v1405
    %v1445 = vmul.f32 1.0, %v1444
    %v1446 = vrcp.pop %v1406
    %v1447 = vmul.f32 1.0, %v1446
    %v1448 = vrcp.pop %v1407
    %v1449 = vmul.f32 1.0, %v1448
    %v1450 = vrcp.pop %v1408
    %v1451 = vmul.f32 1.0, %v1450
    %v1452 = vrcp.pop %v1409
    %v1453 = vmul.f32 1.0, %v1452
    %v1454 = vrcp.pop %v1410
    %v1455 = vmul.f32 1.0, %v1454
    %v1456 = vrcp.pop %v1411
    %v1457 = vmul.f32 1.0, %v1456
    %v1458 = vrcp.pop %v1412
    %v1459 = vmul.f32 1.0, %v1458
    %v1460 = vrcp.pop %v1413
    %v1461 = vmul.f32 1.0, %v1460
    %v1462 = vrcp.pop %v1414
    %v1463 = vmul.f32 1.0, %v1462
    %v1464 = vrcp.pop %v1415
    %v1465 = vmul.f32 1.0, %v1464
    %v1466 = vrcp.pop %v1416
    %v1467 = vmul.f32 1.0, %v1466
    %v1468 = vrcp.pop %v1417
    %v1469 = vmul.f32 1.0, %v1468
    %v1470 = vrcp.pop %v1418
    %v1471 = vmul.f32 1.0, %v1470
    %v1472 = vrcp.pop %v1419
    %v1473 = vmul.f32 1.0, %v1472
    %v1474 = vrcp.pop %v1420
    %v1475 = vmul.f32 1.0, %v1474
    %v1476 = vrcp.pop %v1421
    %v1477 = vmul.f32 1.0, %v1476
    %v1478 = vrcp.pop %v1422
    %v1479 = vmul.f32 1.0, %v1478
    %v1480 = vrcp.pop %v1423
    %v1481 = vmul.f32 1.0, %v1480
    %v1482 = vrcp.pop %v1424
    %v1483 = vmul.f32 1.0, %v1482
    %v1484 = vrcp.pop %v1425
    %v1485 = vmul.f32 1.0, %v1484
    %v1486 = vrcp.pop %v1426
    %v1487 = vmul.f32 1.0, %v1486
    %v1488 = vrcp.pop %v1427
    %v1489 = vmul.f32 1.0, %v1488
    %v1490 = vrcp.pop %v1428
    %v1491 = vmul.f32 1.0, %v1490
    %v1492 = vrcp.pop %v1429
    %v1493 = vmul.f32 1.0, %v1492
    %v1494 = vld [vmem:[%s5] sm:$0x3]
    %v1495 = vpack.c.bf16 %v1433, %v1431
    %v1496 = vpack.c.bf16 %v1437, %v1435
    %v1497 = vpack.c.bf16 %v1441, %v1439
    %v1498 = vpack.c.bf16 %v1445, %v1443
    %v1499 = vpack.c.bf16 %v1449, %v1447
    %v1500 = vpack.c.bf16 %v1453, %v1451
    %v1501 = vpack.c.bf16 %v1457, %v1455
    %v1502 = vpack.c.bf16 %v1461, %v1459
    %v1503 = vpack.c.bf16 %v1465, %v1463
    %v1504 = vpack.c.bf16 %v1469, %v1467
    %v1505 = vpack.c.bf16 %v1473, %v1471
    %v1506 = vpack.c.bf16 %v1477, %v1475
    %v1507 = vpack.c.bf16 %v1481, %v1479
    %v1508 = vpack.c.bf16 %v1485, %v1483
    %v1509 = vpack.c.bf16 %v1489, %v1487
    %v1510 = vpack.c.bf16 %v1493, %v1491
    %v1511 = vld [vmem:[%s6] sm:$0x3]
    %1513 = vset.pattern.permute.xlu0 0
    %1514 = vperm.xlu0 %1513, %v1511
    %v1515 = vpop.permute.xlu0 %1514
    %v1519 = vunpack.c.l.s4 1966171168
    %v1520 = vunpack.c.0.s8 %v1519
    %v1521 = vlaneseq
    %v1522 = vshrl.u32 %v1521, 7
    %v1523 = vsub.s32 %v1520, %v1522
    %v1524 = vrot.slane %v1494, %v1523
    %v1525 = vcombine.high %v1524, %v1524
    %v1527 = vunpack.c.l.s4 1966171168
    %v1528 = vunpack.c.0.s8 %v1527
    %v1529 = vlaneseq
    %v1530 = vshrl.u32 %v1529, 7
    %v1531 = vsub.s32 %v1528, %v1530
    %v1532 = vrot.slane %v1524, %v1531
    %v1534 = vunpack.c.l.s4 1966171168
    %v1535 = vunpack.c.0.s8 %v1534
    %v1536 = vlaneseq
    %v1537 = vshrl.u32 %v1536, 7
    %v1538 = vsub.s32 %v1535, %v1537
    %v1539 = vrot.slane %v1525, %v1538
    %1542 = vmatprep.subr.bf16.mxu0 0
    %1543 = vmatpush1.bf16.msra.mxu0 %v1495
    %1544 = vmatprep.subr.bf16.mxu0 0
    %1545 = vmatpush1.bf16.msra.mxu0 %v1496
    %1546 = vmatprep.subr.bf16.mxu0 0
    %1547 = vmatpush1.bf16.msra.mxu0 %v1497
    %1548 = vmatprep.subr.bf16.mxu0 0
    %1549 = vmatpush1.bf16.msra.mxu0 %v1498
    %1550 = vmatprep.subr.bf16.mxu0 0
    %1551 = vmatpush1.bf16.msra.mxu0 %v1499
    %1552 = vmatprep.subr.bf16.mxu0 0
    %1553 = vmatpush1.bf16.msra.mxu0 %v1500
    %1554 = vmatprep.subr.bf16.mxu0 0
    %1555 = vmatpush1.bf16.msra.mxu0 %v1501
    %1556 = vmatprep.subr.bf16.mxu0 0
    %1557 = vmatpush1.bf16.msra.mxu0 %v1502
    %1558 = vmatprep.subr.bf16.mxu0 0
    %1559 = vmatpush1.bf16.msra.mxu0 %v1503
    %1560 = vmatprep.subr.bf16.mxu0 0
    %1561 = vmatpush1.bf16.msra.mxu0 %v1504
    %1562 = vmatprep.subr.bf16.mxu0 0
    %1563 = vmatpush1.bf16.msra.mxu0 %v1505
    %1564 = vmatprep.subr.bf16.mxu0 0
    %1565 = vmatpush1.bf16.msra.mxu0 %v1506
    %1566 = vmatprep.subr.bf16.mxu0 0
    %1567 = vmatpush1.bf16.msra.mxu0 %v1507
    %1568 = vmatprep.subr.bf16.mxu0 0
    %1569 = vmatpush1.bf16.msra.mxu0 %v1508
    %1570 = vmatprep.subr.bf16.mxu0 0
    %1571 = vmatpush1.bf16.msra.mxu0 %v1509
    %1572 = vmatprep.subr.bf16.mxu0 0
    %1573 = vmatpush1.bf16.msra.mxu0 %v1510
    %1574 = vmatprep.mubr.bf16.mxu0 %v1539
    %1575 = vmatmul.mubr.bf16.gmra.mrb[0].mxu0 %v1532
    %v1576 = vpop.f32.mrb[0].mxu0
    %v1577 = vadd.f32 %v1515, %v1576
    %v1578 = vpop.f32.mrb[0].mxu0
    %v1579 = vpop.f32.mrb[0].mxu0
    %v1580 = vpop.f32.mrb[0].mxu0
    %1581 = vdwg.mxu0
    %vm1582 = vcmask 123904
    %1583 = vst.msk [vmem:[#allocation2] sm:$0x3] %vm1582, %v1577
    // Predicated region
    $region30: #{tpu_custom_call.1} parent=1 // pred_check
      _
    $region31: #{tpu_custom_call.1} parent=1 // pred_check_branch
      %1585 = sbr.rel (0) target = $region33
    $region32: #{tpu_custom_call.1} parent=1 // pred_region
      %s1587 = ssub.s32 32, 32
      %1588 = vsyncadd [#allocation3], %s1587
      %s1590 = sshll.u32 [#allocation2], 4
      %s1591 = int_to_ptr.vmem [resolvable:$true] %s1590
      %1593 = dma.vmem_to_hbm [thread:$0]  %s1591, 32, %s7, [#allocation3]
    $region33: #{tpu_custom_call.1} parent=1 // pred_fallthru
      _
    // Predicated region
    $region34: #{tpu_custom_call.1} parent=1 // pred_check
      _
    $region35: #{tpu_custom_call.1} parent=1 // pred_check_branch
      %1595 = sbr.rel (0) target = $region37
    $region36: #{tpu_custom_call.1} parent=1 // pred_region
      %1596 = dma.done [#allocation3], 32
    $region37: #{tpu_custom_call.1} parent=1 // pred_fallthru
      _
    %1597 = vsyncpa [#allocation3], 1

</llo_original>
